<compile_context>
chip_gen: v7x
topology: tpu7x:2x2x1
jax: 0.10.0
libtpu: 0.0.40
codegen_flags: <defaults>
</compile_context>

<pallas_src>
import jax
import jax.numpy as jnp
import numpy as np
from jax import lax
from jax.experimental import pallas as pl
from jax.experimental.pallas import tpu as pltpu


# ----------------------------- Pallas kernels ------------------------------ #

def _conv_stage_kernel(x_ref, w_ref, scale_ref, shift_ref, o_ref, pool_ref):
    """One sample: Conv3d(k=3, stride=(2,1,1), pad=1) + folded BN + ReLU + spatial mean.

    x_ref:     (T_pad, H_pad, W_pad, Cin)   fully padded sample, T_pad = 2*T_out + 2
    w_ref:     (KT*KH*KW*Cin, Cout)         taps-major flattened weight
    scale_ref: (1, Cout)                    folded BN scale  (gamma / sqrt(var+eps))
    shift_ref: (1, Cout)                    folded BN shift  (beta - mean*scale)
    o_ref:     (T_out, H_out, W_out, Cout)  activations (input to next stage)
    pool_ref:  (T_out, Cout)                mean over the spatial plane
    """
    t_pad, h_pad, w_pad, cin = x_ref.shape
    k_total, cout = w_ref.shape
    t_out, h_out, w_out, _ = o_ref.shape
    t_half = t_pad // 2                       # = t_out + 1

    x = x_ref[...]
    # Pair-split the stride-2 temporal axis so all three temporal taps become
    # contiguous leading-dim slices (no strided access, no frame duplication).
    x5 = x.reshape(t_half, 2, h_pad, w_pad, cin)
    frames = (
        x5[0:t_out, 0],          # frame 2*t      (kt = 0)
        x5[0:t_out, 1],          # frame 2*t + 1  (kt = 1)
        x5[1:t_out + 1, 0],      # frame 2*t + 2  (kt = 2)
    )

    # In-kernel im2col: 27 taps packed along the channel (lane) axis.
    taps = []
    for kt in range(3):
        xt = frames[kt]                                    # (T_out, H_pad, W_pad, Cin)
        for kh in range(3):
            for kw in range(3):
                taps.append(xt[:, kh:kh + h_out, kw:kw + w_out, :])
    patches = jnp.concatenate(taps, axis=-1)               # (T_out, H_out, W_out, 27*Cin)
    patches = patches.reshape(t_out * h_out * w_out, k_total)

    # One deep GEMM on the MXU (bf16 operands, f32 accumulate).
    acc = jnp.dot(patches.astype(jnp.bfloat16),
                  w_ref[...].astype(jnp.bfloat16),
                  preferred_element_type=jnp.float32)      # (M, Cout)

    # Folded BN + ReLU epilogue in f32.
    y = jnp.maximum(acc * scale_ref[0, :] + shift_ref[0, :], 0.0)

    o_ref[...] = y.reshape(t_out, h_out, w_out, cout).astype(o_ref.dtype)
    # Fused AdaptiveAvgPool3d((None, 1, 1)).
    pool = jnp.mean(y.reshape(t_out, h_out * w_out, cout), axis=1)
    pool_ref[...] = pool.astype(pool_ref.dtype)


def _mean_hw_kernel(x_ref, o_ref):
    """Spatial mean pool of the raw input: (T, H*W, C) -> (T, C)."""
    x = x_ref[...].astype(jnp.float32)
    inv = 1.0 / float(x_ref.shape[1])
    o_ref[...] = (jnp.sum(x, axis=1) * inv).astype(o_ref.dtype)


# ----------------------------- wrappers (glue) ------------------------------ #

def conv3d_bn_relu_pool(x, w, scale, shift):
    """x: (N, T, H, W, Cin) channels-last; w: (3, 3, 3, Cin, Cout).

    Returns:
      y:    (N, T_out, H, W, Cout)  conv + BN + ReLU activations
      pool: (N, T_out, Cout)        spatial mean of y
    with T_out = floor((T + 2 - 3) / 2) + 1.
    """
    n, t, h, wdim, cin = x.shape
    kt, kh, kw, _, cout = w.shape
    t_out = (t + 2 - kt) // 2 + 1
    h_out, w_out = h, wdim                      # stride 1, pad 1, kernel 3 spatially
    t_pad = 2 * t_out + 2                       # even; extra right-pad frame unused if T odd
    h_pad, w_pad = h + 2, wdim + 2

    x_p = jnp.pad(x, ((0, 0), (1, t_pad - t - 1), (1, 1), (1, 1), (0, 0)))
    w_flat = w.reshape(kt * kh * kw * cin, cout)          # taps-major, Cin fastest
    scale2 = scale.reshape(1, cout).astype(jnp.float32)
    shift2 = shift.reshape(1, cout).astype(jnp.float32)

    y, pool = pl.pallas_call(
        _conv_stage_kernel,
        out_shape=(jax.ShapeDtypeStruct((n, t_out, h_out, w_out, cout), x.dtype),
                   jax.ShapeDtypeStruct((n, t_out, cout), jnp.float32)),
        grid=(n,),
        in_specs=[
            pl.BlockSpec((None, t_pad, h_pad, w_pad, cin), lambda i: (i, 0, 0, 0, 0)),
            pl.BlockSpec((kt * kh * kw * cin, cout), lambda i: (0, 0)),
            pl.BlockSpec((1, cout), lambda i: (0, 0)),
            pl.BlockSpec((1, cout), lambda i: (0, 0)),
        ],
        out_specs=(
            pl.BlockSpec((None, t_out, h_out, w_out, cout), lambda i: (i, 0, 0, 0, 0)),
            pl.BlockSpec((None, t_out, cout), lambda i: (i, 0, 0)),
        ),
        compiler_params=pltpu.CompilerParams(dimension_semantics=("parallel",)),
    )(x_p, w_flat, scale2, shift2)
    return y, pool


def spatial_mean_pool(x):
    """x: (N, T, H, W, C) -> (N, T, C) mean over spatial dims (raw-input branch only)."""
    n, t, h, w, c = x.shape
    xf = x.reshape(n, t, h * w, c)              # free contiguous reshape in XLA
    return pl.pallas_call(
        _mean_hw_kernel,
        out_shape=jax.ShapeDtypeStruct((n, t, c), jnp.float32),
        grid=(n,),
        in_specs=[pl.BlockSpec((None, t, h * w, c), lambda i: (i, 0, 0, 0))],
        out_specs=pl.BlockSpec((None, t, c), lambda i: (i, 0, 0)),
        compiler_params=pltpu.CompilerParams(dimension_semantics=("parallel",)),
    )(xf)


# ------------------------------- VDM module -------------------------------- #

def init_vdm_params(key, in_channels, out_channels=32, num_stages=4):
    """Deterministic synthetic init (kaiming-like conv, BN eval-mode stats)."""
    params = []
    cin = in_channels
    for _ in range(num_stages):
        key, k_w, k_g, k_b, k_m, k_v = jax.random.split(key, 6)
        fan_in = cin * 3 * 3 * 3
        w = jax.random.normal(k_w, (3, 3, 3, cin, out_channels), jnp.float32) * \
            jnp.sqrt(2.0 / fan_in)
        gamma = 1.0 + 0.1 * jax.random.normal(k_g, (out_channels,), jnp.float32)
        beta = 0.1 * jax.random.normal(k_b, (out_channels,), jnp.float32)
        mean = 0.1 * jax.random.normal(k_m, (out_channels,), jnp.float32)
        var = 1.0 + 0.1 * jax.random.uniform(k_v, (out_channels,), jnp.float32)
        params.append(dict(w=w, gamma=gamma, beta=beta, mean=mean, var=var))
        cin = out_channels
    return params


def vdm_forward(x_ncthw, params, out_indices=(0, 1, 2, 3, 4), out_pooling=True,
                bn_eps=1e-5):
    """VDM.forward.  x_ncthw: (N, C, T, H, W).  Pooled path returns tuple of (N, C_i, T_i)."""
    cur = jnp.transpose(x_ncthw, (0, 2, 3, 4, 1))        # -> (N, T, H, W, C)
    feats, pooled = [], []
    if 0 in out_indices:
        feats.append(cur)
        if out_pooling:
            pooled.append(spatial_mean_pool(cur))
    for i, p in enumerate(params):
        inv_std = 1.0 / jnp.sqrt(p["var"] + bn_eps)
        scale = p["gamma"] * inv_std
        shift = p["beta"] - p["mean"] * scale
        cur, cur_pool = conv3d_bn_relu_pool(cur, p["w"], scale, shift)
        if i + 1 in out_indices:
            feats.append(cur)
            pooled.append(cur_pool)
    if len(feats) == 1:
        return jnp.transpose(feats[0], (0, 4, 1, 2, 3))   # single un-pooled tensor (NCTHW)
    if out_pooling:
        return tuple(jnp.transpose(pq, (0, 2, 1)) for pq in pooled)   # (N, C, T)
    return tuple(jnp.transpose(f, (0, 4, 1, 2, 3)) for f in feats)    # (N, C, T, H, W)


# --------------------------- pure-JAX reference ----------------------------- #

def vdm_reference(x_ncthw, params, bn_eps=1e-5):
    outs = [x_ncthw]
    cur = x_ncthw
    for p in params:
        w_oidhw = jnp.transpose(p["w"], (4, 3, 0, 1, 2))  # (Cout, Cin, 3, 3, 3)
        y = lax.conv_general_dilated(
            cur, w_oidhw, window_strides=(2, 1, 1),
            padding=((1, 1), (1, 1), (1, 1)),
            dimension_numbers=("NCDHW", "OIDHW", "NCDHW"))
        inv_std = 1.0 / jnp.sqrt(p["var"] + bn_eps)
        scale = (p["gamma"] * inv_std)[None, :, None, None, None]
        shift = (p["beta"] - p["mean"] * p["gamma"] * inv_std)[None, :, None, None, None]
        y = jnp.maximum(y * scale + shift, 0.0)
        outs.append(y)
        cur = y
    return tuple(jnp.mean(o, axis=(3, 4)) for o in outs)


# ---------------------------------- main ------------------------------------ #

if __name__ == "__main__":
    key = jax.random.PRNGKey(0)
    k_x, k_p = jax.random.split(key)

    N, C_in, T, H, W = 2, 16, 16, 8, 8        # small shapes; T halves each stage
    C_out = 32
    x = jax.random.normal(k_x, (N, C_in, T, H, W), jnp.float32)
    params = init_vdm_params(k_p, C_in, out_channels=C_out, num_stages=4)

    outs = vdm_forward(x, params)
    outs = jax.block_until_ready(outs)

    # Sanity: shapes match the PyTorch module's pooled outputs (N, C_i, T_i).
    expected_shapes = [(N, C_in, T), (N, C_out, 8), (N, C_out, 4),
                       (N, C_out, 2), (N, C_out, 1)]
    assert len(outs) == len(expected_shapes)
    for o, es in zip(outs, expected_shapes):
        assert o.shape == es, (o.shape, es)

    ref = vdm_reference(x, params)
    for o, r in zip(outs, ref):
        np.testing.assert_allclose(np.asarray(o), np.asarray(r), rtol=5e-2, atol=5e-2)

    print("KERNEL_OK")
</pallas_src>

<mosaic_0001>
module attributes {stable_mosaic.version = 11 : i64} {
  func.func @_mean_hw_kernel(%arg0: i32, %arg1: memref<1x16x64x16xf32, #tpu.memory_space<vmem>>, %arg2: memref<1x16x16xf32, #tpu.memory_space<vmem>>) attributes {dimension_semantics = [#tpu.dimension_semantics<parallel>], iteration_bounds = array<i64: 2>, scalar_prefetch = 0 : i64, scratch_operands = 0 : i64, tpu.core_type = #tpu.core_type<tc>, window_params = [{transform_indices = @transform_0, window_bounds = array<i64: 1, 16, 64, 16>}, {transform_indices = @transform_1, window_bounds = array<i64: 1, 16, 16>}]} {
    %c0 = arith.constant 0 : index
    %c0_0 = arith.constant 0 : index
    %c0_1 = arith.constant 0 : index
    %c0_2 = arith.constant 0 : index
    %0 = vector.load %arg1[%c0, %c0_0, %c0_1, %c0_2] : memref<1x16x64x16xf32, #tpu.memory_space<vmem>>, vector<1x16x64x16xf32>
    %1 = vector.shape_cast %0 : vector<1x16x64x16xf32> to vector<16x64x16xf32>
    %cst = arith.constant dense<0.000000e+00> : vector<16x16xf32>
    %2 = vector.multi_reduction <add>, %1, %cst [1] : vector<16x64x16xf32> to vector<16x16xf32>
    %cst_3 = arith.constant 1.562500e-02 : f32
    %3 = vector.broadcast %cst_3 : f32 to vector<16x16xf32>
    %4 = arith.mulf %2, %3 : vector<16x16xf32>
    %c0_4 = arith.constant 0 : index
    %c0_5 = arith.constant 0 : index
    %c0_6 = arith.constant 0 : index
    %5 = vector.load %arg2[%c0_4, %c0_5, %c0_6] : memref<1x16x16xf32, #tpu.memory_space<vmem>>, vector<1x16x16xf32>
    %6 = vector.shape_cast %5 : vector<1x16x16xf32> to vector<16x16xf32>
    %7 = vector.shape_cast %4 : vector<16x16xf32> to vector<1x16x16xf32>
    tpu.vector_store %arg2[%c0_4, %c0_5, %c0_6], %7 {strides = array<i32>} : memref<1x16x16xf32, #tpu.memory_space<vmem>>, vector<1x16x16xf32>,
    return
  }
  func.func @transform_0(%arg0: i32) -> (i32, i32, i32, i32) {
    %c0_i32 = arith.constant 0 : i32
    %c0_i32_0 = arith.constant 0 : i32
    %c0_i32_1 = arith.constant 0 : i32
    %c0_i32_2 = arith.constant 0 : i32
    return %arg0, %c0_i32, %c0_i32_0, %c0_i32_1 : i32, i32, i32, i32
  }
  func.func @transform_1(%arg0: i32) -> (i32, i32, i32) {
    %c0_i32 = arith.constant 0 : i32
    %c0_i32_0 = arith.constant 0 : i32
    %c0_i32_1 = arith.constant 0 : i32
    return %arg0, %c0_i32, %c0_i32_0 : i32, i32, i32
  }
}

</mosaic_0001>

<llo_original>
// kernel: tpu_custom_call.1
$region0: #{tpu_custom_call.1}
  #allocation0 [shape = 'u32[]', space=smem, size = 0x4, offset = 0x4, fixed_abs, tag = 'smem constant byte address 0x4 - core index']
  #allocation1 [shape = 'u32[144,128]{1,0:T(1,128)}', space=vmem, size = 0x12000, scoped, tag = 'internal scratch']
  %s0 = inlined_call_operand.vmem [shape: f32[2,16,64,16], index: 0, kind: input, shape index: {}]
  %s1 = inlined_call_operand.hbm [shape: f32[2,16,16], index: 1, kind: output, shape index: {}]
  %s2 = sld [smem:[#allocation0]]
  $region37: #{tpu_custom_call.1} parent=0
    _
  %s4 = ssub.s32 1, %s2
  %s5 = scalar_select 0, %s4, %s2
  $region1: #{tpu_custom_call.1} parent=0
    #allocation2 [shape = 'u8[16384]{0}', space=vmem, size = 0x4000, scoped, tag = 'output window, operand 0']
    #allocation3 [shape = 's32[2]{0}', space=sflag, size = 0x8, scoped, tag = 'scoped memory for tpu_custom_call.1']
    %6 = vsyncpa [#allocation3], 0
    %s7 = scalar_lea.sflag [#allocation3], 1
    %8 = vsyncpa %s7, 0
    loop: start=0, step=1, limit=4
    $region2: #{tpu_custom_call.1} parent=1 // loop_pre_header
      _
    $region3: #{tpu_custom_call.1} parent=1 // loop_header
      %s10 = sphi 0, %s14
      %p11 = scmp.ge.s32.totalorder %s10, 4
      %s20 = sphi 0, %s22
      %s23 = sphi 0, %s20
      %s24 = sphi 0, %s23
      %s40 = sphi 0, %s24
      %s46 = sphi 0, %s48
      %s49 = sphi 0, %s46
      %s50 = sphi 0, %s49
      %s66 = sphi 0, %s50
    $region4: #{tpu_custom_call.1} parent=1 // loop_header_branch
      %13 = sbr.rel (%p11) target = $region8
    $region5: #{tpu_custom_call.1} parent=1 // loop_body
      %s15 = ssub.s32 %s10, 1
      %s16 = ssub.s32 %s10, 2
      %s17 = sadd.s32 %s10, 1
      %s18 = ssub.s32 %s10, %s17
      %p19 = scmp.eq.s32.totalorder %s18, 0
      %s21 = sadd.s32 %s20, 1
      %s22 = scalar_select %p19, %s20, %s21
      %p25 = pneg %p19
      %p26 = scmp.eq.s32.totalorder %s10, 1
      %p27 = por %p25, %p26
      %p28 = scmp.ne.s32.totalorder %s20, %s23
      %p29 = scmp.eq.s32.totalorder %s10, 0
      %p30 = por %p28, %p29
      %p31 = scmp.ne.s32.totalorder %s20, %s23
      %p32 = scmp.eq.s32.totalorder %s15, 1
      %p33 = por %p31, %p32
      %p34 = scmp.ne.s32.totalorder %s23, %s24
      %p35 = scmp.eq.s32.totalorder %s15, 0
      %p36 = por %p34, %p35
      %p37 = scmp.ne.s32.totalorder %s23, %s24
      %p38 = scmp.eq.s32.totalorder %s16, 1
      %p39 = por %p37, %p38
      %p41 = scmp.ne.s32.totalorder %s24, %s40
      %p42 = scmp.eq.s32.totalorder %s16, 0
      %p43 = por %p41, %p42
      %s44 = ssub.s32 %s10, %s17
      %p45 = scmp.eq.s32.totalorder %s44, 0
      %s47 = sadd.s32 %s46, 1
      %s48 = scalar_select %p45, %s46, %s47
      %p51 = pneg %p45
      %p52 = scmp.eq.s32.totalorder %s10, 1
      %p53 = por %p51, %p52
      %p54 = scmp.ne.s32.totalorder %s46, %s49
      %p55 = scmp.eq.s32.totalorder %s10, 0
      %p56 = por %p54, %p55
      %p57 = scmp.ne.s32.totalorder %s46, %s49
      %p58 = scmp.eq.s32.totalorder %s15, 1
      %p59 = por %p57, %p58
      %p60 = scmp.ne.s32.totalorder %s49, %s50
      %p61 = scmp.eq.s32.totalorder %s15, 0
      %p62 = por %p60, %p61
      %p63 = scmp.ne.s32.totalorder %s49, %s50
      %p64 = scmp.eq.s32.totalorder %s16, 1
      %p65 = por %p63, %p64
      %p67 = scmp.ne.s32.totalorder %s50, %s66
      %p68 = scmp.eq.s32.totalorder %s16, 0
      %p69 = por %p67, %p68
      %p70 = scmp.le.s32.totalorder 1, %s10
      %p71 = scmp.lt.s32.totalorder %s10, 3
      %p72 = pnand %p70, %p71
      %p73 = pneg %p72
      // Predicated region
      $region9: #{tpu_custom_call.1} parent=5 // pred_check
        _
      $region10: #{tpu_custom_call.1} parent=5 // pred_check_branch
        %75 = sbr.rel (%p72) target = $region12
      $region11: #{tpu_custom_call.1} parent=5 // pred_region
        %s76 = ssub.s32 %s10, 1
      $region12: #{tpu_custom_call.1} parent=5 // pred_fallthru
        _
      %p77 = scmp.lt.s32.totalorder %s10, 2
      // Predicated region
      $region13: #{tpu_custom_call.1} parent=5 // pred_check
        %p78 = pneg %p77
      $region14: #{tpu_custom_call.1} parent=5 // pred_check_branch
        %80 = sbr.rel (%p78) target = $region16
      $region15: #{tpu_custom_call.1} parent=5 // pred_region
        // Predicated region
        $region17: #{tpu_custom_call.1} parent=15 // pred_check
          %p81 = pneg %p30
        $region18: #{tpu_custom_call.1} parent=15 // pred_check_branch
          %83 = sbr.rel (%p81) target = $region20
        $region19: #{tpu_custom_call.1} parent=15 // pred_region
          %p84 = scmp.lt.s32.totalorder %s10, 1
          %s85 = scalar_select %p84, %s10, 1
          %s86 = smul.addr %s85, 128
          %s87 = smul.addr %s86, 8
          %s88 = scalar_lea.vmem %s0, %s87
        $region20: #{tpu_custom_call.1} parent=15 // pred_fallthru
          _
      $region16: #{tpu_custom_call.1} parent=5 // pred_fallthru
        _
      %p89 = scmp.le.s32.totalorder 1, %s10
      %p90 = scmp.lt.s32.totalorder %s10, 3
      %p91 = pnand %p89, %p90
      %p92 = pneg %p91
      // Predicated region
      $region21: #{tpu_custom_call.1} parent=5 // pred_check
        _
      $region22: #{tpu_custom_call.1} parent=5 // pred_check_branch
        %94 = sbr.rel (%p91) target = $region24
      $region23: #{tpu_custom_call.1} parent=5 // pred_region
        %s95 = ssub.s32 %s10, 1
        %p96 = scmp.lt.s32.totalorder %s15, 1
        %s97 = scalar_select %p96, %s15, 1
        %s98 = smul.addr %s97, 128
        %s99 = smul.addr %s98, 8
        %s100 = scalar_lea.vmem %s0, %s99
        %p101 = pneg %p36
        %p102 = pneg %p33
        %p103 = pneg %p62
        %p104 = pneg %p59
        %s105 = sand.u32 %s49, 1
        %s106 = scalar_lea.sflag [#allocation3], %s105
        %s107 = sand.u32 %s49, 1
        %s108 = smul.addr %s107, 16
        %s109 = scalar_lea.vmem [#allocation2], %s108
        %p110 = scmp.lt.s32.totalorder %s15, 1
        %s111 = scalar_select %p110, %s15, 1
        %s112 = smul.addr %s111, 128
        %s113 = smul.addr %s112, 8
        %s114 = scalar_lea.vmem %s0, %s113
        %v115 = vld [vmem:[%s114] sm:$0xff]
        %v116 = vld [vmem:[%s114 + $0x8] sm:$0xff]
        %v117 = vld [vmem:[%s114 + $0x10] sm:$0xff]
        %v118 = vld [vmem:[%s114 + $0x18] sm:$0xff]
        %v119 = vld [vmem:[%s114 + $0x20] sm:$0xff]
        %v120 = vld [vmem:[%s114 + $0x28] sm:$0xff]
        %v121 = vld [vmem:[%s114 + $0x30] sm:$0xff]
        %v122 = vld [vmem:[%s114 + $0x38] sm:$0xff]
        %v123 = vld [vmem:[%s114 + $0x40] sm:$0xff]
        %v124 = vld [vmem:[%s114 + $0x48] sm:$0xff]
        %v125 = vld [vmem:[%s114 + $0x50] sm:$0xff]
        %v126 = vld [vmem:[%s114 + $0x58] sm:$0xff]
        %v127 = vld [vmem:[%s114 + $0x60] sm:$0xff]
        %v128 = vld [vmem:[%s114 + $0x68] sm:$0xff]
        %v129 = vld [vmem:[%s114 + $0x70] sm:$0xff]
        %v130 = vld [vmem:[%s114 + $0x78] sm:$0xff]
        %v131 = vld [vmem:[%s114 + $0x80] sm:$0xff]
        %v132 = vld [vmem:[%s114 + $0x88] sm:$0xff]
        %v133 = vld [vmem:[%s114 + $0x90] sm:$0xff]
        %v134 = vld [vmem:[%s114 + $0x98] sm:$0xff]
        %v135 = vld [vmem:[%s114 + $0xa0] sm:$0xff]
        %v136 = vld [vmem:[%s114 + $0xa8] sm:$0xff]
        %v137 = vld [vmem:[%s114 + $0xb0] sm:$0xff]
        %v138 = vld [vmem:[%s114 + $0xb8] sm:$0xff]
        %v139 = vld [vmem:[%s114 + $0xc0] sm:$0xff]
        %v140 = vld [vmem:[%s114 + $0xc8] sm:$0xff]
        %v141 = vld [vmem:[%s114 + $0xd0] sm:$0xff]
        %v142 = vld [vmem:[%s114 + $0xd8] sm:$0xff]
        %v143 = vld [vmem:[%s114 + $0xe0] sm:$0xff]
        %v144 = vld [vmem:[%s114 + $0xe8] sm:$0xff]
        %v145 = vld [vmem:[%s114 + $0xf0] sm:$0xff]
        %v146 = vld [vmem:[%s114 + $0xf8] sm:$0xff]
        %v147 = vld [vmem:[%s114 + $0x100] sm:$0xff]
        %v148 = vld [vmem:[%s114 + $0x108] sm:$0xff]
        %v149 = vld [vmem:[%s114 + $0x110] sm:$0xff]
        %v150 = vld [vmem:[%s114 + $0x118] sm:$0xff]
        %v151 = vld [vmem:[%s114 + $0x120] sm:$0xff]
        %v152 = vld [vmem:[%s114 + $0x128] sm:$0xff]
        %v153 = vld [vmem:[%s114 + $0x130] sm:$0xff]
        %v154 = vld [vmem:[%s114 + $0x138] sm:$0xff]
        %v155 = vld [vmem:[%s114 + $0x140] sm:$0xff]
        %v156 = vld [vmem:[%s114 + $0x148] sm:$0xff]
        %v157 = vld [vmem:[%s114 + $0x150] sm:$0xff]
        %v158 = vld [vmem:[%s114 + $0x158] sm:$0xff]
        %v159 = vld [vmem:[%s114 + $0x160] sm:$0xff]
        %v160 = vld [vmem:[%s114 + $0x168] sm:$0xff]
        %v161 = vld [vmem:[%s114 + $0x170] sm:$0xff]
        %v162 = vld [vmem:[%s114 + $0x178] sm:$0xff]
        %v163 = vld [vmem:[%s114 + $0x180] sm:$0xff]
        %v164 = vld [vmem:[%s114 + $0x188] sm:$0xff]
        %v165 = vld [vmem:[%s114 + $0x190] sm:$0xff]
        %v166 = vld [vmem:[%s114 + $0x198] sm:$0xff]
        %v167 = vld [vmem:[%s114 + $0x1a0] sm:$0xff]
        %v168 = vld [vmem:[%s114 + $0x1a8] sm:$0xff]
        %v169 = vld [vmem:[%s114 + $0x1b0] sm:$0xff]
        %v170 = vld [vmem:[%s114 + $0x1b8] sm:$0xff]
        %v171 = vld [vmem:[%s114 + $0x1c0] sm:$0xff]
        %v172 = vld [vmem:[%s114 + $0x1c8] sm:$0xff]
        %v173 = vld [vmem:[%s114 + $0x1d0] sm:$0xff]
        %v174 = vld [vmem:[%s114 + $0x1d8] sm:$0xff]
        %v175 = vld [vmem:[%s114 + $0x1e0] sm:$0xff]
        %v176 = vld [vmem:[%s114 + $0x1e8] sm:$0xff]
        %v177 = vld [vmem:[%s114 + $0x1f0] sm:$0xff]
        %v178 = vld [vmem:[%s114 + $0x1f8] sm:$0xff]
        %v179 = vld [vmem:[%s114 + $0x200] sm:$0xff]
        %v180 = vld [vmem:[%s114 + $0x208] sm:$0xff]
        %v181 = vld [vmem:[%s114 + $0x210] sm:$0xff]
        %v182 = vld [vmem:[%s114 + $0x218] sm:$0xff]
        %v183 = vld [vmem:[%s114 + $0x220] sm:$0xff]
        %v184 = vld [vmem:[%s114 + $0x228] sm:$0xff]
        %v185 = vld [vmem:[%s114 + $0x230] sm:$0xff]
        %v186 = vld [vmem:[%s114 + $0x238] sm:$0xff]
        %v187 = vld [vmem:[%s114 + $0x240] sm:$0xff]
        %v188 = vld [vmem:[%s114 + $0x248] sm:$0xff]
        %v189 = vld [vmem:[%s114 + $0x250] sm:$0xff]
        %v190 = vld [vmem:[%s114 + $0x258] sm:$0xff]
        %v191 = vld [vmem:[%s114 + $0x260] sm:$0xff]
        %v192 = vld [vmem:[%s114 + $0x268] sm:$0xff]
        %v193 = vld [vmem:[%s114 + $0x270] sm:$0xff]
        %v194 = vld [vmem:[%s114 + $0x278] sm:$0xff]
        %v195 = vld [vmem:[%s114 + $0x280] sm:$0xff]
        %v196 = vld [vmem:[%s114 + $0x288] sm:$0xff]
        %v197 = vld [vmem:[%s114 + $0x290] sm:$0xff]
        %v198 = vld [vmem:[%s114 + $0x298] sm:$0xff]
        %v199 = vld [vmem:[%s114 + $0x2a0] sm:$0xff]
        %v200 = vld [vmem:[%s114 + $0x2a8] sm:$0xff]
        %v201 = vld [vmem:[%s114 + $0x2b0] sm:$0xff]
        %v202 = vld [vmem:[%s114 + $0x2b8] sm:$0xff]
        %v203 = vld [vmem:[%s114 + $0x2c0] sm:$0xff]
        %v204 = vld [vmem:[%s114 + $0x2c8] sm:$0xff]
        %v205 = vld [vmem:[%s114 + $0x2d0] sm:$0xff]
        %v206 = vld [vmem:[%s114 + $0x2d8] sm:$0xff]
        %v207 = vld [vmem:[%s114 + $0x2e0] sm:$0xff]
        %v208 = vld [vmem:[%s114 + $0x2e8] sm:$0xff]
        %v209 = vld [vmem:[%s114 + $0x2f0] sm:$0xff]
        %v210 = vld [vmem:[%s114 + $0x2f8] sm:$0xff]
        %v211 = vld [vmem:[%s114 + $0x300] sm:$0xff]
        %v212 = vld [vmem:[%s114 + $0x308] sm:$0xff]
        %v213 = vld [vmem:[%s114 + $0x310] sm:$0xff]
        %v214 = vld [vmem:[%s114 + $0x318] sm:$0xff]
        %v215 = vld [vmem:[%s114 + $0x320] sm:$0xff]
        %v216 = vld [vmem:[%s114 + $0x328] sm:$0xff]
        %v217 = vld [vmem:[%s114 + $0x330] sm:$0xff]
        %v218 = vld [vmem:[%s114 + $0x338] sm:$0xff]
        %v219 = vld [vmem:[%s114 + $0x340] sm:$0xff]
        %v220 = vld [vmem:[%s114 + $0x348] sm:$0xff]
        %v221 = vld [vmem:[%s114 + $0x350] sm:$0xff]
        %v222 = vld [vmem:[%s114 + $0x358] sm:$0xff]
        %v223 = vld [vmem:[%s114 + $0x360] sm:$0xff]
        %v224 = vld [vmem:[%s114 + $0x368] sm:$0xff]
        %v225 = vld [vmem:[%s114 + $0x370] sm:$0xff]
        %v226 = vld [vmem:[%s114 + $0x378] sm:$0xff]
        %v227 = vld [vmem:[%s114 + $0x380] sm:$0xff]
        %v228 = vld [vmem:[%s114 + $0x388] sm:$0xff]
        %v229 = vld [vmem:[%s114 + $0x390] sm:$0xff]
        %v230 = vld [vmem:[%s114 + $0x398] sm:$0xff]
        %v231 = vld [vmem:[%s114 + $0x3a0] sm:$0xff]
        %v232 = vld [vmem:[%s114 + $0x3a8] sm:$0xff]
        %v233 = vld [vmem:[%s114 + $0x3b0] sm:$0xff]
        %v234 = vld [vmem:[%s114 + $0x3b8] sm:$0xff]
        %v235 = vld [vmem:[%s114 + $0x3c0] sm:$0xff]
        %v236 = vld [vmem:[%s114 + $0x3c8] sm:$0xff]
        %v237 = vld [vmem:[%s114 + $0x3d0] sm:$0xff]
        %v238 = vld [vmem:[%s114 + $0x3d8] sm:$0xff]
        %v239 = vld [vmem:[%s114 + $0x3e0] sm:$0xff]
        %v240 = vld [vmem:[%s114 + $0x3e8] sm:$0xff]
        %v241 = vld [vmem:[%s114 + $0x3f0] sm:$0xff]
        %v242 = vld [vmem:[%s114 + $0x3f8] sm:$0xff]
        %vm243 = vcmask 130048
        %v244 = vsel %vm243, %v115, 0.0
        %v245 = vsel %vm243, %v116, 0.0
        %v246 = vadd.f32 %v244, %v245
        %v247 = vsel %vm243, %v117, 0.0
        %v248 = vadd.f32 %v246, %v247
        %v249 = vsel %vm243, %v118, 0.0
        %v250 = vadd.f32 %v248, %v249
        %v251 = vsel %vm243, %v119, 0.0
        %v252 = vadd.f32 %v250, %v251
        %v253 = vsel %vm243, %v120, 0.0
        %v254 = vadd.f32 %v252, %v253
        %v255 = vsel %vm243, %v121, 0.0
        %v256 = vadd.f32 %v254, %v255
        %v257 = vsel %vm243, %v122, 0.0
        %v258 = vadd.f32 %v256, %v257
        %v259 = vrot.slane %v258, 4
        %v260 = vadd.f32 %v258, %v259
        %v261 = vrot.slane %v260, 2
        %v262 = vadd.f32 %v260, %v261
        %v263 = vrot.slane %v262, 1
        %v264 = vadd.f32 %v262, %v263
        %v265 = vsel %vm243, %v123, 0.0
        %v266 = vsel %vm243, %v124, 0.0
        %v267 = vadd.f32 %v265, %v266
        %v268 = vsel %vm243, %v125, 0.0
        %v269 = vadd.f32 %v267, %v268
        %v270 = vsel %vm243, %v126, 0.0
        %v271 = vadd.f32 %v269, %v270
        %v272 = vsel %vm243, %v127, 0.0
        %v273 = vadd.f32 %v271, %v272
        %v274 = vsel %vm243, %v128, 0.0
        %v275 = vadd.f32 %v273, %v274
        %v276 = vsel %vm243, %v129, 0.0
        %v277 = vadd.f32 %v275, %v276
        %v278 = vsel %vm243, %v130, 0.0
        %v279 = vadd.f32 %v277, %v278
        %v280 = vrot.slane %v279, 4
        %v281 = vadd.f32 %v279, %v280
        %v282 = vrot.slane %v281, 2
        %v283 = vadd.f32 %v281, %v282
        %v284 = vrot.slane %v283, 1
        %v285 = vadd.f32 %v283, %v284
        %v286 = vsel %vm243, %v131, 0.0
        %v287 = vsel %vm243, %v132, 0.0
        %v288 = vadd.f32 %v286, %v287
        %v289 = vsel %vm243, %v133, 0.0
        %v290 = vadd.f32 %v288, %v289
        %v291 = vsel %vm243, %v134, 0.0
        %v292 = vadd.f32 %v290, %v291
        %v293 = vsel %vm243, %v135, 0.0
        %v294 = vadd.f32 %v292, %v293
        %v295 = vsel %vm243, %v136, 0.0
        %v296 = vadd.f32 %v294, %v295
        %v297 = vsel %vm243, %v137, 0.0
        %v298 = vadd.f32 %v296, %v297
        %v299 = vsel %vm243, %v138, 0.0
        %v300 = vadd.f32 %v298, %v299
        %v301 = vrot.slane %v300, 4
        %v302 = vadd.f32 %v300, %v301
        %v303 = vrot.slane %v302, 2
        %v304 = vadd.f32 %v302, %v303
        %v305 = vrot.slane %v304, 1
        %v306 = vadd.f32 %v304, %v305
        %v307 = vsel %vm243, %v139, 0.0
        %v308 = vsel %vm243, %v140, 0.0
        %v309 = vadd.f32 %v307, %v308
        %v310 = vsel %vm243, %v141, 0.0
        %v311 = vadd.f32 %v309, %v310
        %v312 = vsel %vm243, %v142, 0.0
        %v313 = vadd.f32 %v311, %v312
        %v314 = vsel %vm243, %v143, 0.0
        %v315 = vadd.f32 %v313, %v314
        %v316 = vsel %vm243, %v144, 0.0
        %v317 = vadd.f32 %v315, %v316
        %v318 = vsel %vm243, %v145, 0.0
        %v319 = vadd.f32 %v317, %v318
        %v320 = vsel %vm243, %v146, 0.0
        %v321 = vadd.f32 %v319, %v320
        %v322 = vrot.slane %v321, 4
        %v323 = vadd.f32 %v321, %v322
        %v324 = vrot.slane %v323, 2
        %v325 = vadd.f32 %v323, %v324
        %v326 = vrot.slane %v325, 1
        %v327 = vadd.f32 %v325, %v326
        %v328 = vsel %vm243, %v147, 0.0
        %v329 = vsel %vm243, %v148, 0.0
        %v330 = vadd.f32 %v328, %v329
        %v331 = vsel %vm243, %v149, 0.0
        %v332 = vadd.f32 %v330, %v331
        %v333 = vsel %vm243, %v150, 0.0
        %v334 = vadd.f32 %v332, %v333
        %v335 = vsel %vm243, %v151, 0.0
        %v336 = vadd.f32 %v334, %v335
        %v337 = vsel %vm243, %v152, 0.0
        %v338 = vadd.f32 %v336, %v337
        %v339 = vsel %vm243, %v153, 0.0
        %v340 = vadd.f32 %v338, %v339
        %v341 = vsel %vm243, %v154, 0.0
        %v342 = vadd.f32 %v340, %v341
        %v343 = vrot.slane %v342, 4
        %v344 = vadd.f32 %v342, %v343
        %v345 = vrot.slane %v344, 2
        %v346 = vadd.f32 %v344, %v345
        %v347 = vrot.slane %v346, 1
        %v348 = vadd.f32 %v346, %v347
        %v349 = vsel %vm243, %v155, 0.0
        %v350 = vsel %vm243, %v156, 0.0
        %v351 = vadd.f32 %v349, %v350
        %v352 = vsel %vm243, %v157, 0.0
        %v353 = vadd.f32 %v351, %v352
        %v354 = vsel %vm243, %v158, 0.0
        %v355 = vadd.f32 %v353, %v354
        %v356 = vsel %vm243, %v159, 0.0
        %v357 = vadd.f32 %v355, %v356
        %v358 = vsel %vm243, %v160, 0.0
        %v359 = vadd.f32 %v357, %v358
        %v360 = vsel %vm243, %v161, 0.0
        %v361 = vadd.f32 %v359, %v360
        %v362 = vsel %vm243, %v162, 0.0
        %v363 = vadd.f32 %v361, %v362
        %v364 = vrot.slane %v363, 4
        %v365 = vadd.f32 %v363, %v364
        %v366 = vrot.slane %v365, 2
        %v367 = vadd.f32 %v365, %v366
        %v368 = vrot.slane %v367, 1
        %v369 = vadd.f32 %v367, %v368
        %v370 = vsel %vm243, %v163, 0.0
        %v371 = vsel %vm243, %v164, 0.0
        %v372 = vadd.f32 %v370, %v371
        %v373 = vsel %vm243, %v165, 0.0
        %v374 = vadd.f32 %v372, %v373
        %v375 = vsel %vm243, %v166, 0.0
        %v376 = vadd.f32 %v374, %v375
        %v377 = vsel %vm243, %v167, 0.0
        %v378 = vadd.f32 %v376, %v377
        %v379 = vsel %vm243, %v168, 0.0
        %v380 = vadd.f32 %v378, %v379
        %v381 = vsel %vm243, %v169, 0.0
        %v382 = vadd.f32 %v380, %v381
        %v383 = vsel %vm243, %v170, 0.0
        %v384 = vadd.f32 %v382, %v383
        %v385 = vrot.slane %v384, 4
        %v386 = vadd.f32 %v384, %v385
        %v387 = vrot.slane %v386, 2
        %v388 = vadd.f32 %v386, %v387
        %v389 = vrot.slane %v388, 1
        %v390 = vadd.f32 %v388, %v389
        %v391 = vsel %vm243, %v171, 0.0
        %v392 = vsel %vm243, %v172, 0.0
        %v393 = vadd.f32 %v391, %v392
        %v394 = vsel %vm243, %v173, 0.0
        %v395 = vadd.f32 %v393, %v394
        %v396 = vsel %vm243, %v174, 0.0
        %v397 = vadd.f32 %v395, %v396
        %v398 = vsel %vm243, %v175, 0.0
        %v399 = vadd.f32 %v397, %v398
        %v400 = vsel %vm243, %v176, 0.0
        %v401 = vadd.f32 %v399, %v400
        %v402 = vsel %vm243, %v177, 0.0
        %v403 = vadd.f32 %v401, %v402
        %v404 = vsel %vm243, %v178, 0.0
        %v405 = vadd.f32 %v403, %v404
        %v406 = vrot.slane %v405, 4
        %v407 = vadd.f32 %v405, %v406
        %v408 = vrot.slane %v407, 2
        %v409 = vadd.f32 %v407, %v408
        %v410 = vrot.slane %v409, 1
        %v411 = vadd.f32 %v409, %v410
        %v412 = vsel %vm243, %v179, 0.0
        %v413 = vsel %vm243, %v180, 0.0
        %v414 = vadd.f32 %v412, %v413
        %v415 = vsel %vm243, %v181, 0.0
        %v416 = vadd.f32 %v414, %v415
        %v417 = vsel %vm243, %v182, 0.0
        %v418 = vadd.f32 %v416, %v417
        %v419 = vsel %vm243, %v183, 0.0
        %v420 = vadd.f32 %v418, %v419
        %v421 = vsel %vm243, %v184, 0.0
        %v422 = vadd.f32 %v420, %v421
        %v423 = vsel %vm243, %v185, 0.0
        %v424 = vadd.f32 %v422, %v423
        %v425 = vsel %vm243, %v186, 0.0
        %v426 = vadd.f32 %v424, %v425
        %v427 = vrot.slane %v426, 4
        %v428 = vadd.f32 %v426, %v427
        %v429 = vrot.slane %v428, 2
        %v430 = vadd.f32 %v428, %v429
        %v431 = vrot.slane %v430, 1
        %v432 = vadd.f32 %v430, %v431
        %v433 = vsel %vm243, %v187, 0.0
        %v434 = vsel %vm243, %v188, 0.0
        %v435 = vadd.f32 %v433, %v434
        %v436 = vsel %vm243, %v189, 0.0
        %v437 = vadd.f32 %v435, %v436
        %v438 = vsel %vm243, %v190, 0.0
        %v439 = vadd.f32 %v437, %v438
        %v440 = vsel %vm243, %v191, 0.0
        %v441 = vadd.f32 %v439, %v440
        %v442 = vsel %vm243, %v192, 0.0
        %v443 = vadd.f32 %v441, %v442
        %v444 = vsel %vm243, %v193, 0.0
        %v445 = vadd.f32 %v443, %v444
        %v446 = vsel %vm243, %v194, 0.0
        %v447 = vadd.f32 %v445, %v446
        %v448 = vrot.slane %v447, 4
        %v449 = vadd.f32 %v447, %v448
        %v450 = vrot.slane %v449, 2
        %v451 = vadd.f32 %v449, %v450
        %v452 = vrot.slane %v451, 1
        %v453 = vadd.f32 %v451, %v452
        %v454 = vsel %vm243, %v195, 0.0
        %v455 = vsel %vm243, %v196, 0.0
        %v456 = vadd.f32 %v454, %v455
        %v457 = vsel %vm243, %v197, 0.0
        %v458 = vadd.f32 %v456, %v457
        %v459 = vsel %vm243, %v198, 0.0
        %v460 = vadd.f32 %v458, %v459
        %v461 = vsel %vm243, %v199, 0.0
        %v462 = vadd.f32 %v460, %v461
        %v463 = vsel %vm243, %v200, 0.0
        %v464 = vadd.f32 %v462, %v463
        %v465 = vsel %vm243, %v201, 0.0
        %v466 = vadd.f32 %v464, %v465
        %v467 = vsel %vm243, %v202, 0.0
        %v468 = vadd.f32 %v466, %v467
        %v469 = vrot.slane %v468, 4
        %v470 = vadd.f32 %v468, %v469
        %v471 = vrot.slane %v470, 2
        %v472 = vadd.f32 %v470, %v471
        %v473 = vrot.slane %v472, 1
        %v474 = vadd.f32 %v472, %v473
        %v475 = vsel %vm243, %v203, 0.0
        %v476 = vsel %vm243, %v204, 0.0
        %v477 = vadd.f32 %v475, %v476
        %v478 = vsel %vm243, %v205, 0.0
        %v479 = vadd.f32 %v477, %v478
        %v480 = vsel %vm243, %v206, 0.0
        %v481 = vadd.f32 %v479, %v480
        %v482 = vsel %vm243, %v207, 0.0
        %v483 = vadd.f32 %v481, %v482
        %v484 = vsel %vm243, %v208, 0.0
        %v485 = vadd.f32 %v483, %v484
        %v486 = vsel %vm243, %v209, 0.0
        %v487 = vadd.f32 %v485, %v486
        %v488 = vsel %vm243, %v210, 0.0
        %v489 = vadd.f32 %v487, %v488
        %v490 = vrot.slane %v489, 4
        %v491 = vadd.f32 %v489, %v490
        %v492 = vrot.slane %v491, 2
        %v493 = vadd.f32 %v491, %v492
        %v494 = vrot.slane %v493, 1
        %v495 = vadd.f32 %v493, %v494
        %v496 = vsel %vm243, %v211, 0.0
        %v497 = vsel %vm243, %v212, 0.0
        %v498 = vadd.f32 %v496, %v497
        %v499 = vsel %vm243, %v213, 0.0
        %v500 = vadd.f32 %v498, %v499
        %v501 = vsel %vm243, %v214, 0.0
        %v502 = vadd.f32 %v500, %v501
        %v503 = vsel %vm243, %v215, 0.0
        %v504 = vadd.f32 %v502, %v503
        %v505 = vsel %vm243, %v216, 0.0
        %v506 = vadd.f32 %v504, %v505
        %v507 = vsel %vm243, %v217, 0.0
        %v508 = vadd.f32 %v506, %v507
        %v509 = vsel %vm243, %v218, 0.0
        %v510 = vadd.f32 %v508, %v509
        %v511 = vrot.slane %v510, 4
        %v512 = vadd.f32 %v510, %v511
        %v513 = vrot.slane %v512, 2
        %v514 = vadd.f32 %v512, %v513
        %v515 = vrot.slane %v514, 1
        %v516 = vadd.f32 %v514, %v515
        %v517 = vsel %vm243, %v219, 0.0
        %v518 = vsel %vm243, %v220, 0.0
        %v519 = vadd.f32 %v517, %v518
        %v520 = vsel %vm243, %v221, 0.0
        %v521 = vadd.f32 %v519, %v520
        %v522 = vsel %vm243, %v222, 0.0
        %v523 = vadd.f32 %v521, %v522
        %v524 = vsel %vm243, %v223, 0.0
        %v525 = vadd.f32 %v523, %v524
        %v526 = vsel %vm243, %v224, 0.0
        %v527 = vadd.f32 %v525, %v526
        %v528 = vsel %vm243, %v225, 0.0
        %v529 = vadd.f32 %v527, %v528
        %v530 = vsel %vm243, %v226, 0.0
        %v531 = vadd.f32 %v529, %v530
        %v532 = vrot.slane %v531, 4
        %v533 = vadd.f32 %v531, %v532
        %v534 = vrot.slane %v533, 2
        %v535 = vadd.f32 %v533, %v534
        %v536 = vrot.slane %v535, 1
        %v537 = vadd.f32 %v535, %v536
        %v538 = vsel %vm243, %v227, 0.0
        %v539 = vsel %vm243, %v228, 0.0
        %v540 = vadd.f32 %v538, %v539
        %v541 = vsel %vm243, %v229, 0.0
        %v542 = vadd.f32 %v540, %v541
        %v543 = vsel %vm243, %v230, 0.0
        %v544 = vadd.f32 %v542, %v543
        %v545 = vsel %vm243, %v231, 0.0
        %v546 = vadd.f32 %v544, %v545
        %v547 = vsel %vm243, %v232, 0.0
        %v548 = vadd.f32 %v546, %v547
        %v549 = vsel %vm243, %v233, 0.0
        %v550 = vadd.f32 %v548, %v549
        %v551 = vsel %vm243, %v234, 0.0
        %v552 = vadd.f32 %v550, %v551
        %v553 = vrot.slane %v552, 4
        %v554 = vadd.f32 %v552, %v553
        %v555 = vrot.slane %v554, 2
        %v556 = vadd.f32 %v554, %v555
        %v557 = vrot.slane %v556, 1
        %v558 = vadd.f32 %v556, %v557
        %v559 = vsel %vm243, %v235, 0.0
        %v560 = vsel %vm243, %v236, 0.0
        %v561 = vadd.f32 %v559, %v560
        %v562 = vsel %vm243, %v237, 0.0
        %v563 = vadd.f32 %v561, %v562
        %v564 = vsel %vm243, %v238, 0.0
        %v565 = vadd.f32 %v563, %v564
        %v566 = vsel %vm243, %v239, 0.0
        %v567 = vadd.f32 %v565, %v566
        %v568 = vsel %vm243, %v240, 0.0
        %v569 = vadd.f32 %v567, %v568
        %v570 = vsel %vm243, %v241, 0.0
        %v571 = vadd.f32 %v569, %v570
        %v572 = vsel %vm243, %v242, 0.0
        %v573 = vadd.f32 %v571, %v572
        %v574 = vrot.slane %v573, 4
        %v575 = vadd.f32 %v573, %v574
        %v576 = vrot.slane %v575, 2
        %v577 = vadd.f32 %v575, %v576
        %v578 = vrot.slane %v577, 1
        %v579 = vadd.f32 %v577, %v578
        %v580 = vmul.f32 %v264, 0.015625
        %v581 = vmul.f32 %v285, 0.015625
        %v582 = vmul.f32 %v306, 0.015625
        %v583 = vmul.f32 %v327, 0.015625
        %v584 = vmul.f32 %v348, 0.015625
        %v585 = vmul.f32 %v369, 0.015625
        %v586 = vmul.f32 %v390, 0.015625
        %v587 = vmul.f32 %v411, 0.015625
        %v588 = vmul.f32 %v432, 0.015625
        %v589 = vmul.f32 %v453, 0.015625
        %v590 = vmul.f32 %v474, 0.015625
        %v591 = vmul.f32 %v495, 0.015625
        %v592 = vmul.f32 %v516, 0.015625
        %v593 = vmul.f32 %v537, 0.015625
        %v594 = vmul.f32 %v558, 0.015625
        %v595 = vmul.f32 %v579, 0.015625
        %vm612 = vcmask 1041409
        %v613 = vsel %vm612, %v581, %v580
        %vm614 = vcmask 1042434
        %v615 = vsel %vm614, %v582, %v613
        %vm616 = vcmask 1043459
        %v617 = vsel %vm616, %v583, %v615
        %vm618 = vcmask 1044484
        %v619 = vsel %vm618, %v584, %v617
        %vm620 = vcmask 1045509
        %v621 = vsel %vm620, %v585, %v619
        %vm622 = vcmask 1046534
        %v623 = vsel %vm622, %v586, %v621
        %vm624 = vcmask 1047559
        %v625 = vsel %vm624, %v587, %v623
        %v626 = vsel %vm612, %v589, %v588
        %v627 = vsel %vm614, %v590, %v626
        %v628 = vsel %vm616, %v591, %v627
        %v629 = vsel %vm618, %v592, %v628
        %v630 = vsel %vm620, %v593, %v629
        %v631 = vsel %vm622, %v594, %v630
        %v632 = vsel %vm624, %v595, %v631
        %635 = vst.msk [vmem:[%s109] sm:$0xff] %vm243, %v625
        %636 = vst.msk [vmem:[%s109 + $0x8] sm:$0xff] %vm243, %v632
        %s637 = sand.u32 %s49, 1
        %s638 = scalar_lea.sflag [#allocation3], %s637
        %s639 = sand.u32 %s49, 1
        %s640 = smul.addr %s639, 16
        %s641 = scalar_lea.vmem [#allocation2], %s640
        // Predicated region
        $region25: #{tpu_custom_call.1} parent=23 // pred_check
          %p642 = pneg %p59
        $region26: #{tpu_custom_call.1} parent=23 // pred_check_branch
          %644 = sbr.rel (%p642) target = $region28
        $region27: #{tpu_custom_call.1} parent=23 // pred_region
          %s646 = ssub.s32 256, 256
          %647 = vsyncadd %s638, %s646
          %s648 = smul.addr %s15, 2
          %s649 = smul.addr %s648, 128
          %s650 = scalar_lea.hbm %s1, %s649
          %s651 = sshll.u32 %s641, 4
          %s652 = int_to_ptr.vmem [resolvable:$true] %s651
          %657 = dma.vmem_to_hbm [thread:$0]  %s652, 256, %s650, %s638, 128, 128, 8
        $region28: #{tpu_custom_call.1} parent=23 // pred_fallthru
          _
      $region24: #{tpu_custom_call.1} parent=5 // pred_fallthru
        _
      %p658 = scmp.le.s32.totalorder 2, %s10
      // Predicated region
      $region29: #{tpu_custom_call.1} parent=5 // pred_check
        %p659 = pneg %p658
      $region30: #{tpu_custom_call.1} parent=5 // pred_check_branch
        %661 = sbr.rel (%p659) target = $region32
      $region31: #{tpu_custom_call.1} parent=5 // pred_region
        %s662 = ssub.s32 %s10, 2
        // Predicated region
        $region33: #{tpu_custom_call.1} parent=31 // pred_check
          %p663 = pneg %p65
        $region34: #{tpu_custom_call.1} parent=31 // pred_check_branch
          %665 = sbr.rel (%p663) target = $region36
        $region35: #{tpu_custom_call.1} parent=31 // pred_region
          %s666 = sand.u32 %s50, 1
          %s667 = scalar_lea.sflag [#allocation3], %s666
          %s668 = sand.u32 %s50, 1
          %s669 = smul.addr %s668, 16
          %s670 = scalar_lea.vmem [#allocation2], %s669
          %671 = dma.done %s667, 256
        $region36: #{tpu_custom_call.1} parent=31 // pred_fallthru
          _
      $region32: #{tpu_custom_call.1} parent=5 // pred_fallthru
        _
    $region6: #{tpu_custom_call.1} parent=1 // loop_footer
      %s14 = sadd.s32 1, %s10
    $region7: #{tpu_custom_call.1} parent=1 // loop_footer_branch
      %9 = sbr.rel target = $region3
    $region8: #{tpu_custom_call.1} parent=1 // loop_exit
      _
    %672 = vsyncpa [#allocation3], 1
    %s673 = scalar_lea.sflag [#allocation3], 1
    %674 = vsyncpa %s673, 1

</llo_original>
